<compile_context>
chip_gen: v5e
topology: v5e:2x2
jax: 0.10.0
libtpu: 0.0.40
codegen_flags: <defaults>
</compile_context>

<pallas_src>
import jax
import jax.numpy as jnp
from jax.experimental import pallas as pl
from jax.experimental.pallas import tpu as pltpu


def _round_up(x: int, m: int) -> int:
    return ((x + m - 1) // m) * m


def head_kernel(cls_ref, w1_ref, b1_ref, w2_ref, b2_ref, o_ref, h_ref):
    # Grid = (batch_tile i, class_tile j); j is the fastest-varying (serial) axis.
    # Compute the hidden layer once per batch tile; keep it in VMEM scratch.
    @pl.when(pl.program_id(1) == 0)
    def _():
        h = jnp.dot(cls_ref[...], w1_ref[...],
                    preferred_element_type=jnp.float32)           # [bm, mlp] f32 acc
        h_ref[...] = h + b1_ref[...]

    # Dropout(p=0.0) is the identity in this module's forward; nothing to emit.
    out = jnp.dot(h_ref[...].astype(jnp.bfloat16), w2_ref[...],
                  preferred_element_type=jnp.float32)             # [bm, bn] f32 acc
    o_ref[...] = (out + b2_ref[...]).astype(o_ref.dtype)


def image_classification_head(x, w1, b1, w2, b2):
    """x: [B, S, D]; w1: [D, mlp] bf16; b1: [1, mlp] f32; w2: [mlp, C] bf16; b2: [1, C] f32."""
    B, _, D = x.shape
    mlp_dim = w1.shape[1]
    num_classes = w2.shape[1]

    # 1) Slice the CLS token in the wrapper: only [B, D] enters the kernel.
    cls = x[:, 0, :]

    # 2) Pad batch to a sublane-dense M and classes to a lane-dense multiple of 128.
    bm = 128 if B >= 128 else _round_up(B, 8)
    B_pad = _round_up(B, bm)
    bn = 128
    C_pad = _round_up(num_classes, bn)

    cls_p = jnp.pad(cls, ((0, B_pad - B), (0, 0))).astype(jnp.bfloat16)
    w1 = w1.astype(jnp.bfloat16)
    w2_p = jnp.pad(w2.astype(jnp.bfloat16), ((0, 0), (0, C_pad - num_classes)))
    b1 = b1.astype(jnp.float32)
    b2_p = jnp.pad(b2.astype(jnp.float32), ((0, 0), (0, C_pad - num_classes)))

    grid = (B_pad // bm, C_pad // bn)

    out_pad = pl.pallas_call(
        head_kernel,
        out_shape=jax.ShapeDtypeStruct((B_pad, C_pad), jnp.float32),
        grid_spec=pltpu.PrefetchScalarGridSpec(
            num_scalar_prefetch=0,
            grid=grid,
            in_specs=[
                pl.BlockSpec((bm, D), lambda i, j: (i, 0)),        # CLS rows only
                pl.BlockSpec((D, mlp_dim), lambda i, j: (0, 0)),   # w1: fetched once
                pl.BlockSpec((1, mlp_dim), lambda i, j: (0, 0)),   # b1: fetched once
                pl.BlockSpec((mlp_dim, bn), lambda i, j: (0, j)),  # w2: streamed per class tile
                pl.BlockSpec((1, bn), lambda i, j: (0, j)),        # b2 tile
            ],
            out_specs=pl.BlockSpec((bm, bn), lambda i, j: (i, j)),
            scratch_shapes=[pltpu.VMEM((bm, mlp_dim), jnp.float32)],
        ),
        compiler_params=pltpu.CompilerParams(
            dimension_semantics=("parallel", "arbitrary"),
            vmem_limit_bytes=32 * 1024 * 1024,
        ),
    )(cls_p, w1, b1, w2_p, b2_p)

    # Drop batch/class padding (padded logits are zero and never exposed).
    return out_pad[:B, :num_classes]


def init_params(key, dim, mlp_dim, num_classes):
    """Deterministic synthetic init (Linear-like). Weights (in, out), bf16; biases f32."""
    k1, k2, k3, k4 = jax.random.split(key, 4)
    s1 = 1.0 / jnp.sqrt(dim)
    s2 = 1.0 / jnp.sqrt(mlp_dim)
    w1 = jax.random.uniform(k1, (dim, mlp_dim), jnp.float32, -s1, s1).astype(jnp.bfloat16)
    b1 = jax.random.uniform(k2, (1, mlp_dim), jnp.float32, -s1, s1)
    w2 = jax.random.uniform(k3, (mlp_dim, num_classes), jnp.float32, -s2, s2).astype(jnp.bfloat16)
    b2 = jax.random.uniform(k4, (1, num_classes), jnp.float32, -s2, s2)
    return w1, b1, w2, b2


if __name__ == "__main__":
    # Shapes implied by forward: x is [batch, seq, dim]; head uses only token 0.
    B, S, D = 2, 8, 32
    MLP_DIM, NUM_CLASSES = 128, 10

    key = jax.random.PRNGKey(0)
    kx, kp = jax.random.split(key)
    x = jax.random.normal(kx, (B, S, D), jnp.float32)
    w1, b1, w2, b2 = init_params(kp, D, MLP_DIM, NUM_CLASSES)

    out = image_classification_head(x, w1, b1, w2, b2)
    out = jax.block_until_ready(out)

    # Pure-JAX reference with identical dtype policy (bf16 operands, f32 accumulation).
    cls = x[:, 0].astype(jnp.bfloat16)
    h = jnp.dot(cls, w1, preferred_element_type=jnp.float32) + b1
    ref = jnp.dot(h.astype(jnp.bfloat16), w2, preferred_element_type=jnp.float32) + b2

    assert out.shape == (B, NUM_CLASSES)
    assert jnp.allclose(out, ref, atol=1e-2, rtol=1e-2), float(jnp.max(jnp.abs(out - ref)))

    print("KERNEL_OK")
</pallas_src>

<mosaic_0001>
module attributes {stable_mosaic.version = 11 : i64} {
  func.func @head_kernel(%arg0: i32, %arg1: i32, %arg2: memref<8x32xbf16, #tpu.memory_space<vmem>>, %arg3: memref<32x128xbf16, #tpu.memory_space<vmem>>, %arg4: memref<1x128xf32, #tpu.memory_space<vmem>>, %arg5: memref<128x128xbf16, #tpu.memory_space<vmem>>, %arg6: memref<1x128xf32, #tpu.memory_space<vmem>>, %arg7: memref<8x128xf32, #tpu.memory_space<vmem>>, %arg8: memref<8x128xf32, #tpu.memory_space<vmem>>) attributes {dimension_semantics = [#tpu.dimension_semantics<parallel>, #tpu.dimension_semantics<arbitrary>], iteration_bounds = array<i64: 1, 1>, scalar_prefetch = 0 : i64, scratch_operands = 1 : i64, tpu.core_type = #tpu.core_type<tc>, window_params = [{transform_indices = @transform_0, window_bounds = array<i64: 8, 32>}, {pipeline_mode = #tpu.pipeline_mode<synchronous>, transform_indices = @transform_1, window_bounds = array<i64: 32, 128>}, {pipeline_mode = #tpu.pipeline_mode<synchronous>, transform_indices = @transform_2, window_bounds = array<i64: 1, 128>}, {transform_indices = @transform_3, window_bounds = array<i64: 128, 128>}, {transform_indices = @transform_4, window_bounds = array<i64: 1, 128>}, {transform_indices = @transform_5, window_bounds = array<i64: 8, 128>}]} {
    %c0_i32 = arith.constant 0 : i32
    %0 = arith.cmpi eq, %arg1, %c0_i32 : i32
    %1 = arith.extui %0 : i1 to i32
    %c0_i32_0 = arith.constant 0 : i32
    %2 = arith.cmpi ne, %1, %c0_i32_0 : i32
    scf.if %2 {
      %c0_8 = arith.constant 0 : index
      %c0_9 = arith.constant 0 : index
      %11 = vector.load %arg2[%c0_8, %c0_9] : memref<8x32xbf16, #tpu.memory_space<vmem>>, vector<8x32xbf16>
      %c0_10 = arith.constant 0 : index
      %c0_11 = arith.constant 0 : index
      %12 = vector.load %arg3[%c0_10, %c0_11] : memref<32x128xbf16, #tpu.memory_space<vmem>>, vector<32x128xbf16>
      %cst_12 = arith.constant dense<0.000000e+00> : vector<8x128xf32>
      %13 = tpu.matmul %11, %12, %cst_12 {dimension_numbers = #tpu.dot_dimension_numbers<[1], [0], [0], [1], [0, 0, 1, 1], [], []>} : vector<8x32xbf16>, vector<32x128xbf16>, vector<8x128xf32> -> vector<8x128xf32>
      %c0_13 = arith.constant 0 : index
      %c0_14 = arith.constant 0 : index
      %14 = vector.load %arg4[%c0_13, %c0_14] : memref<1x128xf32, #tpu.memory_space<vmem>>, vector<1x128xf32>
      %15 = vector.broadcast %14 : vector<1x128xf32> to vector<8x128xf32>
      %16 = arith.addf %13, %15 : vector<8x128xf32>
      %c0_15 = arith.constant 0 : index
      %c0_16 = arith.constant 0 : index
      %17 = vector.load %arg8[%c0_15, %c0_16] : memref<8x128xf32, #tpu.memory_space<vmem>>, vector<8x128xf32>
      tpu.vector_store %arg8[%c0_15, %c0_16], %16 {strides = array<i32>} : memref<8x128xf32, #tpu.memory_space<vmem>>, vector<8x128xf32>,
    } else {
    }
    %c0 = arith.constant 0 : index
    %c0_1 = arith.constant 0 : index
    %3 = vector.load %arg8[%c0, %c0_1] : memref<8x128xf32, #tpu.memory_space<vmem>>, vector<8x128xf32>
    %4 = arith.truncf %3 : vector<8x128xf32> to vector<8x128xbf16>
    %c0_2 = arith.constant 0 : index
    %c0_3 = arith.constant 0 : index
    %5 = vector.load %arg5[%c0_2, %c0_3] : memref<128x128xbf16, #tpu.memory_space<vmem>>, vector<128x128xbf16>
    %cst = arith.constant dense<0.000000e+00> : vector<8x128xf32>
    %6 = tpu.matmul %4, %5, %cst {dimension_numbers = #tpu.dot_dimension_numbers<[1], [0], [0], [1], [0, 0, 1, 1], [], []>} : vector<8x128xbf16>, vector<128x128xbf16>, vector<8x128xf32> -> vector<8x128xf32>
    %c0_4 = arith.constant 0 : index
    %c0_5 = arith.constant 0 : index
    %7 = vector.load %arg6[%c0_4, %c0_5] : memref<1x128xf32, #tpu.memory_space<vmem>>, vector<1x128xf32>
    %8 = vector.broadcast %7 : vector<1x128xf32> to vector<8x128xf32>
    %9 = arith.addf %6, %8 : vector<8x128xf32>
    %c0_6 = arith.constant 0 : index
    %c0_7 = arith.constant 0 : index
    %10 = vector.load %arg7[%c0_6, %c0_7] : memref<8x128xf32, #tpu.memory_space<vmem>>, vector<8x128xf32>
    tpu.vector_store %arg7[%c0_6, %c0_7], %9 {strides = array<i32>} : memref<8x128xf32, #tpu.memory_space<vmem>>, vector<8x128xf32>,
    return
  }
  func.func @transform_0(%arg0: i32, %arg1: i32) -> (i32, i32) {
    %c0_i32 = arith.constant 0 : i32
    %c0_i32_0 = arith.constant 0 : i32
    return %arg0, %c0_i32 : i32, i32
  }
  func.func @transform_1(%arg0: i32, %arg1: i32) -> (i32, i32) {
    %c0_i32 = arith.constant 0 : i32
    %c0_i32_0 = arith.constant 0 : i32
    %c0_i32_1 = arith.constant 0 : i32
    return %c0_i32, %c0_i32_0 : i32, i32
  }
  func.func @transform_2(%arg0: i32, %arg1: i32) -> (i32, i32) {
    %c0_i32 = arith.constant 0 : i32
    %c0_i32_0 = arith.constant 0 : i32
    %c0_i32_1 = arith.constant 0 : i32
    return %c0_i32, %c0_i32_0 : i32, i32
  }
  func.func @transform_3(%arg0: i32, %arg1: i32) -> (i32, i32) {
    %c0_i32 = arith.constant 0 : i32
    %c0_i32_0 = arith.constant 0 : i32
    return %c0_i32, %arg1 : i32, i32
  }
  func.func @transform_4(%arg0: i32, %arg1: i32) -> (i32, i32) {
    %c0_i32 = arith.constant 0 : i32
    %c0_i32_0 = arith.constant 0 : i32
    return %c0_i32, %arg1 : i32, i32
  }
  func.func @transform_5(%arg0: i32, %arg1: i32) -> (i32, i32) {
    %c0_i32 = arith.constant 0 : i32
    return %arg0, %arg1 : i32, i32
  }
}

</mosaic_0001>

<llo_original>
// kernel: tpu_custom_call.1
$region0: #{tpu_custom_call.1}
  #allocation0 [shape = 'u32[]', space=smem, size = 0x4, offset = 0x4, fixed_abs, tag = 'smem constant byte address 0x4 - core index']
  #allocation1 [shape = 'u32[72,128]{1,0:T(1,128)}', space=vmem, size = 0x9000, scoped, tag = 'internal scratch']
  #allocation2 [shape = 'f32[8,128]{1,0:T(8,128)}', space=vmem, size = 0x1000, scoped, tag = 'scratch operand']
  %s0 = inlined_call_operand.hbm [shape: bf16[8,32], index: 0, kind: input, shape index: {}]
  %s1 = inlined_call_operand.hbm [shape: bf16[32,128], index: 1, kind: input, shape index: {}]
  %s2 = inlined_call_operand.vmem [shape: f32[1,128], index: 2, kind: input, shape index: {}]
  %s3 = inlined_call_operand.hbm [shape: bf16[128,128], index: 3, kind: input, shape index: {}]
  %s4 = inlined_call_operand.vmem [shape: f32[1,128], index: 4, kind: input, shape index: {}]
  %s5 = inlined_call_operand.hbm [shape: f32[8,128], index: 5, kind: output, shape index: {}]
  %s6 = sld [smem:[#allocation0]]
  $region46: #{tpu_custom_call.1} parent=0
    _
  %s8 = ssub.s32 1, %s6
  %s9 = scalar_select 0, %s8, %s6
  $region1: #{tpu_custom_call.1} parent=0
    #allocation3 [shape = 'u8[2048]{0}', space=vmem, size = 0x800, scoped, tag = 'input window, operand 0, single buffered']
    #allocation4 [shape = 's32[1]{0}', space=sflag, size = 0x4, scoped, tag = 'scoped memory for tpu_custom_call.1']
    #allocation5 [shape = 's32[1]{0}', space=sflag, size = 0x4, scoped, tag = 'scoped memory for tpu_custom_call.1']
    #allocation6 [shape = 'u8[8192]{0}', space=vmem, size = 0x2000, scoped, tag = 'input window, operand 1, single buffered']
    #allocation7 [shape = 's32[1]{0}', space=sflag, size = 0x4, scoped, tag = 'scoped memory for tpu_custom_call.1']
    #allocation8 [shape = 'u8[32768]{0}', space=vmem, size = 0x8000, scoped, tag = 'input window, operand 3, single buffered']
    #allocation9 [shape = 'u8[4096]{0}', space=vmem, size = 0x1000, scoped, tag = 'output window, operand 0, single buffered']
    %10 = vsyncpa [#allocation4], 0
    %11 = vsyncpa [#allocation7], 0
    %12 = vsyncpa [#allocation5], 0
    // Predicated region
    $region2: #{tpu_custom_call.1} parent=1 // pred_check
      _
    $region3: #{tpu_custom_call.1} parent=1 // pred_check_branch
      %14 = sbr.rel (0) target = $region5
    $region4: #{tpu_custom_call.1} parent=1 // pred_region
      %16 = vsyncadd [#allocation4], 0
      %s18 = sshll.u32 %s0, 4
      %s19 = int_to_ptr.hbm [resolvable:$true] %s18
      %s20 = sshll.u32 [#allocation3], 4
      %s21 = int_to_ptr.vmem [resolvable:$true] %s20
      %23 = dma.hbm_to_vmem [thread:$0]  %s19, 64, %s21, [#allocation4]
    $region5: #{tpu_custom_call.1} parent=1 // pred_fallthru
      _
    // Predicated region
    $region6: #{tpu_custom_call.1} parent=1 // pred_check
      _
    $region7: #{tpu_custom_call.1} parent=1 // pred_check_branch
      %25 = sbr.rel (0) target = $region9
    $region8: #{tpu_custom_call.1} parent=1 // pred_region
      %27 = vsyncadd [#allocation7], 0
      %s28 = sshll.u32 %s1, 4
      %s29 = int_to_ptr.hbm [resolvable:$true] %s28
      %s30 = sshll.u32 [#allocation6], 4
      %s31 = int_to_ptr.vmem [resolvable:$true] %s30
      %36 = dma.hbm_to_vmem [thread:$0]  %s29, 256, %s31, [#allocation7], 64, 64, 4
    $region9: #{tpu_custom_call.1} parent=1 // pred_fallthru
      _
    // Predicated region
    $region10: #{tpu_custom_call.1} parent=1 // pred_check
      _
    $region11: #{tpu_custom_call.1} parent=1 // pred_check_branch
      %38 = sbr.rel (0) target = $region13
    $region12: #{tpu_custom_call.1} parent=1 // pred_region
      _
    $region13: #{tpu_custom_call.1} parent=1 // pred_fallthru
      _
    // Predicated region
    $region14: #{tpu_custom_call.1} parent=1 // pred_check
      _
    $region15: #{tpu_custom_call.1} parent=1 // pred_check_branch
      %40 = sbr.rel (0) target = $region17
    $region16: #{tpu_custom_call.1} parent=1 // pred_region
      %42 = vsyncadd [#allocation7], 0
      %s43 = sshll.u32 %s3, 4
      %s44 = int_to_ptr.hbm [resolvable:$true] %s43
      %s45 = sshll.u32 [#allocation8], 4
      %s46 = int_to_ptr.vmem [resolvable:$true] %s45
      %51 = dma.hbm_to_vmem [thread:$0]  %s44, 1024, %s46, [#allocation7], 64, 64, 4
    $region17: #{tpu_custom_call.1} parent=1 // pred_fallthru
      _
    // Predicated region
    $region18: #{tpu_custom_call.1} parent=1 // pred_check
      _
    $region19: #{tpu_custom_call.1} parent=1 // pred_check_branch
      %53 = sbr.rel (0) target = $region21
    $region20: #{tpu_custom_call.1} parent=1 // pred_region
      _
    $region21: #{tpu_custom_call.1} parent=1 // pred_fallthru
      _
    // Predicated region
    $region22: #{tpu_custom_call.1} parent=1 // pred_check
      _
    $region23: #{tpu_custom_call.1} parent=1 // pred_check_branch
      %55 = sbr.rel (0) target = $region25
    $region24: #{tpu_custom_call.1} parent=1 // pred_region
      %57 = dma.done [#allocation4], 64
    $region25: #{tpu_custom_call.1} parent=1 // pred_fallthru
      _
    // Predicated region
    $region26: #{tpu_custom_call.1} parent=1 // pred_check
      _
    $region27: #{tpu_custom_call.1} parent=1 // pred_check_branch
      %59 = sbr.rel (0) target = $region29
    $region28: #{tpu_custom_call.1} parent=1 // pred_region
      %61 = dma.done [#allocation7], 256
    $region29: #{tpu_custom_call.1} parent=1 // pred_fallthru
      _
    // Predicated region
    $region30: #{tpu_custom_call.1} parent=1 // pred_check
      _
    $region31: #{tpu_custom_call.1} parent=1 // pred_check_branch
      %63 = sbr.rel (0) target = $region33
    $region32: #{tpu_custom_call.1} parent=1 // pred_region
      %65 = dma.done [#allocation7], 1024
    $region33: #{tpu_custom_call.1} parent=1 // pred_fallthru
      _
    %p67 = scmp.eq.s32.totalorder 0, 0
    // Predicated region
    $region34: #{tpu_custom_call.1} parent=1 // pred_check
      %p68 = pneg %p67
    $region35: #{tpu_custom_call.1} parent=1 // pred_check_branch
      %70 = sbr.rel (%p68) target = $region37
    $region36: #{tpu_custom_call.1} parent=1 // pred_region
      %v71 = vld [vmem:[#allocation3] sm:$0xf]
      %v72 = vld [vmem:[#allocation6] sm:$0xf]
      %v73 = vld [vmem:[#allocation6 + $0x4] sm:$0xf]
      %v74 = vld [vmem:[#allocation6 + $0x8] sm:$0xf]
      %v75 = vld [vmem:[#allocation6 + $0xc] sm:$0xf]
      %v76 = vld [vmem:[%s2] sm:$0x1]
      %v78 = vperm.slane %v76, 0
      %v84 = vunpack.c.l.b16 %v72
      %v85 = vunpack.c.l.b16 %v73
      %v86 = vunpack.c.l.b16 %v74
      %v87 = vunpack.c.l.b16 %v75
      %v88 = vpack.c.b16 %v85, %v84
      %v89 = vpack.c.b16 %v87, %v86
      %vm92 = vcmask 261120
      %v94 = vsel %vm92, %v71, 0
      %96 = vmatpush.bf16.msra.mxu0 0
      %97 = vmatpush.bf16.msra.mxu0 0
      %98 = vmatpush.bf16.msra.mxu0 0
      %99 = vmatpush.bf16.msra.mxu0 0
      %100 = vmatpush.bf16.msra.mxu0 0
      %101 = vmatpush.bf16.msra.mxu0 0
      %102 = vmatpush.bf16.msra.mxu0 %v89
      %103 = vmatpush.bf16.msra.mxu0 %v88
      %104 = vmatmul.bf16.gmra.mxu0 %v94
      %v105 = vpop.f32.mrf.mxu0
      %v106 = vadd.f32 %v78, %v105
      %v107 = vpop.f32.mrf.mxu0
      %108 = vdwg.mxu0
      %109 = vst [vmem:[#allocation2] sm:$0xff] %v106
    $region37: #{tpu_custom_call.1} parent=1 // pred_fallthru
      _
    %v110 = vld [vmem:[#allocation2] sm:$0xff]
    %v111 = vpack.c.bf16 %v110, %v110
    %v112 = vld [vmem:[#allocation8] sm:$0xf]
    %v113 = vld [vmem:[#allocation8 + $0x4] sm:$0xf]
    %v114 = vld [vmem:[#allocation8 + $0x8] sm:$0xf]
    %v115 = vld [vmem:[#allocation8 + $0xc] sm:$0xf]
    %v116 = vld [vmem:[#allocation8 + $0x10] sm:$0xf]
    %v117 = vld [vmem:[#allocation8 + $0x14] sm:$0xf]
    %v118 = vld [vmem:[#allocation8 + $0x18] sm:$0xf]
    %v119 = vld [vmem:[#allocation8 + $0x1c] sm:$0xf]
    %v120 = vld [vmem:[#allocation8 + $0x20] sm:$0xf]
    %v121 = vld [vmem:[#allocation8 + $0x24] sm:$0xf]
    %v122 = vld [vmem:[#allocation8 + $0x28] sm:$0xf]
    %v123 = vld [vmem:[#allocation8 + $0x2c] sm:$0xf]
    %v124 = vld [vmem:[#allocation8 + $0x30] sm:$0xf]
    %v125 = vld [vmem:[#allocation8 + $0x34] sm:$0xf]
    %v126 = vld [vmem:[#allocation8 + $0x38] sm:$0xf]
    %v127 = vld [vmem:[#allocation8 + $0x3c] sm:$0xf]
    %v128 = vld [vmem:[%s4] sm:$0x1]
    %v130 = vperm.slane %v128, 0
    %v148 = vunpack.c.l.b16 %v112
    %v149 = vunpack.c.l.b16 %v113
    %v150 = vunpack.c.l.b16 %v114
    %v151 = vunpack.c.l.b16 %v115
    %v152 = vunpack.c.l.b16 %v116
    %v153 = vunpack.c.l.b16 %v117
    %v154 = vunpack.c.l.b16 %v118
    %v155 = vunpack.c.l.b16 %v119
    %v156 = vunpack.c.l.b16 %v120
    %v157 = vunpack.c.l.b16 %v121
    %v158 = vunpack.c.l.b16 %v122
    %v159 = vunpack.c.l.b16 %v123
    %v160 = vunpack.c.l.b16 %v124
    %v161 = vunpack.c.l.b16 %v125
    %v162 = vunpack.c.l.b16 %v126
    %v163 = vunpack.c.l.b16 %v127
    %v164 = vpack.c.b16 %v149, %v148
    %v165 = vpack.c.b16 %v151, %v150
    %v166 = vpack.c.b16 %v153, %v152
    %v167 = vpack.c.b16 %v155, %v154
    %v168 = vpack.c.b16 %v157, %v156
    %v169 = vpack.c.b16 %v159, %v158
    %v170 = vpack.c.b16 %v161, %v160
    %v171 = vpack.c.b16 %v163, %v162
    %180 = vmatpush.bf16.msra.mxu0 %v171
    %181 = vmatpush.bf16.msra.mxu0 %v170
    %182 = vmatpush.bf16.msra.mxu0 %v169
    %183 = vmatpush.bf16.msra.mxu0 %v168
    %184 = vmatpush.bf16.msra.mxu0 %v167
    %185 = vmatpush.bf16.msra.mxu0 %v166
    %186 = vmatpush.bf16.msra.mxu0 %v165
    %187 = vmatpush.bf16.msra.mxu0 %v164
    %188 = vmatmul.bf16.gmra.mxu0 %v111
    %v189 = vpop.f32.mrf.mxu0
    %v190 = vadd.f32 %v130, %v189
    %v191 = vpop.f32.mrf.mxu0
    %192 = vdwg.mxu0
    %193 = vst [vmem:[#allocation9] sm:$0xff] %v190
    // Predicated region
    $region38: #{tpu_custom_call.1} parent=1 // pred_check
      _
    $region39: #{tpu_custom_call.1} parent=1 // pred_check_branch
      %195 = sbr.rel (0) target = $region41
    $region40: #{tpu_custom_call.1} parent=1 // pred_region
      %197 = vsyncadd [#allocation5], 0
      %s199 = sshll.u32 [#allocation9], 4
      %s200 = int_to_ptr.vmem [resolvable:$true] %s199
      %s201 = sshll.u32 %s5, 4
      %s202 = int_to_ptr.hbm [resolvable:$true] %s201
      %204 = dma.vmem_to_hbm [thread:$0]  %s200, 128, %s202, [#allocation5]
    $region41: #{tpu_custom_call.1} parent=1 // pred_fallthru
      _
    // Predicated region
    $region42: #{tpu_custom_call.1} parent=1 // pred_check
      _
    $region43: #{tpu_custom_call.1} parent=1 // pred_check_branch
      %206 = sbr.rel (0) target = $region45
    $region44: #{tpu_custom_call.1} parent=1 // pred_region
      %208 = dma.done [#allocation5], 128
    $region45: #{tpu_custom_call.1} parent=1 // pred_fallthru
      _
    %209 = vsyncpa [#allocation4], 1
    %210 = vsyncpa [#allocation7], 1
    %211 = vsyncpa [#allocation5], 1

</llo_original>
